<compile_context>
chip_gen: v5e
topology: v5e:2x2
jax: 0.10.0
libtpu: 0.0.40
codegen_flags: <defaults>
</compile_context>

<pallas_src>
import functools

import numpy as np
import jax
import jax.numpy as jnp
from jax import lax
from jax.experimental import pallas as pl
from jax.experimental.pallas import tpu as pltpu


_LANE = 128


def _round_up(x, m):
    return (x + m - 1) // m * m


def _pick_row_tile(n_rows, n_batch, target=1024):
    """Row tile (multiple of 128 lanes).

    Large tiles amortize the ~0.35us per-grid-step overhead and keep stores
    lane-dense, but the tile is capped so the (batch, row) grid keeps >= 4
    steps and both v7x TensorCores get work on small calls.
    """
    tr = min(_round_up(n_rows, _LANE), _round_up(target, _LANE))
    while tr > _LANE and n_batch * pl.cdiv(n_rows, tr) < 4:
        new_tr = max(_LANE, _round_up(tr // 2, _LANE))
        if new_tr == tr:
            break
        tr = new_tr
    return tr


def _mm_bias_lrelu_kernel(p_ref, w_ref, b_ref, o_ref, *, leak):
    """One (batch, row-tile) step: MXU matmul + bias + LeakyReLU.

    p_ref : (1, Kc_pad, TR)  bf16 channel-major im2col patches
    w_ref : (Cout, Kc_pad)   bf16 flattened filters
    b_ref : (Cout, 1)        f32 bias
    o_ref : (1, Cout, TR)    output tile (f32 or bf16), lane-dense stores
    """
    acc = jnp.dot(w_ref[...], p_ref[0], preferred_element_type=jnp.float32)
    acc = acc + b_ref[...]
    o_ref[0] = jnp.where(acc >= 0, acc, leak * acc).astype(o_ref.dtype)


def _mm_bias_lrelu_res_kernel(p_ref, w_ref, b_ref, r_ref, o_ref, *, leak):
    """Same as above with the residual identity add fused (post-activation)."""
    acc = jnp.dot(w_ref[...], p_ref[0], preferred_element_type=jnp.float32)
    acc = acc + b_ref[...]
    y = jnp.where(acc >= 0, acc, leak * acc)
    o_ref[0] = (y + r_ref[0].astype(jnp.float32)).astype(o_ref.dtype)


def conv3d_lrelu(x, w, b, leak, residual=None, *, out_dtype=jnp.float32,
                 row_tile=1024):
    """Conv3d(stride 1, padding=K//2) + LeakyReLU (+ fused residual add).

    x        : (N, Cin, D, H, W)   NCDHW, any float dtype
    w        : (K, K, K, Cin, Cout) DHWIO
    b        : (Cout,)
    residual : optional (N, Cout, D, H, W), added after the activation.
    returns  : (N, Cout, D, H, W) in out_dtype
    """
    N, Cin, D, H, W = x.shape
    K = w.shape[0]
    Cout = w.shape[-1]
    # 'same' padding below reproduces PyTorch only for odd kernel sizes.
    assert K % 2 == 1, "even kernel_size not supported"
    pad = K // 2

    R = D * H * W
    Kc = K * K * K * Cin

    # Channel-major im2col patches (N, Kc, R); feature order is (cin, kd, kh, kw).
    # Spatial zero padding is folded into the patch extraction.
    if K == 1:
        patches = x.reshape(N, Cin, R).astype(jnp.bfloat16)
    else:
        patches = lax.conv_general_dilated_patches(
            x.astype(jnp.bfloat16), (K, K, K), (1, 1, 1), [(pad, pad)] * 3,
            dimension_numbers=("NCDHW", "DHWIO", "NCDHW"))
        patches = patches.reshape(N, Kc, R)

    Kc_pad = _round_up(Kc, 16)          # bf16 sublane pack; no-op for aligned Cin
    TR = _pick_row_tile(R, N, row_tile)
    R_pad = pl.cdiv(R, TR) * TR

    if (Kc_pad, R_pad) != (Kc, R):
        patches = jnp.pad(patches, ((0, 0), (0, Kc_pad - Kc), (0, R_pad - R)))

    # Flattened filters (Cout, Kc) matching the (cin, kd, kh, kw) patch ordering.
    w_mat = jnp.transpose(w, (4, 3, 0, 1, 2)).reshape(Cout, Kc).astype(jnp.bfloat16)
    if Kc_pad != Kc:
        w_mat = jnp.pad(w_mat, ((0, 0), (0, Kc_pad - Kc)))
    b_col = b.reshape(Cout, 1).astype(jnp.float32)

    grid = (N, R_pad // TR)
    in_specs = [
        pl.BlockSpec((1, Kc_pad, TR), lambda n, r: (n, 0, r)),
        pl.BlockSpec((Cout, Kc_pad), lambda n, r: (0, 0)),
        pl.BlockSpec((Cout, 1), lambda n, r: (0, 0)),
    ]
    args = [patches, w_mat, b_col]

    if residual is None:
        kern = functools.partial(_mm_bias_lrelu_kernel, leak=leak)
    else:
        # Residual stays unpadded along channels and in its native dtype.
        res = residual.reshape(N, Cout, R)
        if R_pad != R:
            res = jnp.pad(res, ((0, 0), (0, 0), (0, R_pad - R)))
        in_specs.append(pl.BlockSpec((1, Cout, TR), lambda n, r: (n, 0, r)))
        args.append(res)
        kern = functools.partial(_mm_bias_lrelu_res_kernel, leak=leak)

    out = pl.pallas_call(
        kern,
        out_shape=jax.ShapeDtypeStruct((N, Cout, R_pad), out_dtype),
        grid=grid,
        in_specs=in_specs,
        out_specs=pl.BlockSpec((1, Cout, TR), lambda n, r: (n, 0, r)),
        compiler_params=pltpu.CompilerParams(
            dimension_semantics=("parallel", "parallel")),
    )(*args)

    if R_pad != R:
        out = out[:, :, :R]
    return out.reshape(N, Cout, D, H, W)


def conv3d_lrelu_ref(x, w, b, leak, residual=None, *, out_dtype=None,
                     row_tile=None):
    """Pure-JAX f32 reference (NCDHW) for correctness checking."""
    del out_dtype, row_tile
    p = w.shape[0] // 2
    y = lax.conv_general_dilated(
        x.astype(jnp.float32), w, window_strides=(1, 1, 1),
        padding=[(p, p)] * 3,
        dimension_numbers=("NCDHW", "DHWIO", "NCDHW"))
    y = y + b.reshape(1, -1, 1, 1, 1)
    y = jnp.where(y >= 0, y, leak * y)
    if residual is not None:
        y = y + residual.astype(jnp.float32)
    return y


class Conv3DBlockPallas:
    """JAX/Pallas port of ligan Conv3DBlock (block_type 'c'/'r'/'d', no BN/SN/bottleneck)."""

    def __init__(self, key, n_convs, n_channels_in, n_channels_out,
                 block_type="c", kernel_size=3, relu_leak=0.1, growth_rate=8):
        assert block_type in ("c", "r", "d"), block_type
        self.residual = block_type == "r"
        self.dense = block_type == "d"
        self.relu_leak = relu_leak
        self.skip_params = None
        self.final_params = None

        keys = jax.random.split(key, n_convs + 2)

        def make_conv(k, cin, cout, ksz):
            # Deterministic init, PyTorch-style uniform(-1/sqrt(fan_in), 1/sqrt(fan_in)).
            bound = 1.0 / np.sqrt(cin * ksz ** 3)
            kw_, kb_ = jax.random.split(k)
            w = jax.random.uniform(kw_, (ksz, ksz, ksz, cin, cout),
                                   jnp.float32, -bound, bound)
            bias = jax.random.uniform(kb_, (cout,), jnp.float32, -bound, bound)
            return (w, bias)

        if self.residual and n_channels_out != n_channels_in:
            self.skip_params = make_conv(keys[-1], n_channels_in, n_channels_out, 1)
        if self.dense:
            self.final_params = make_conv(
                keys[-2], n_channels_in + n_convs * growth_rate, n_channels_out, 1)
            n_channels_out = growth_rate

        self.conv_params = []
        cin = n_channels_in
        for i in range(n_convs):
            self.conv_params.append(make_conv(keys[i], cin, n_channels_out, kernel_size))
            cin = cin + n_channels_out if self.dense else n_channels_out

    def _forward(self, x, conv_fn):
        # x: (N, C, D, H, W) NCDHW
        if not self.conv_params:
            return x
        leak = self.relu_leak
        inputs = x
        all_inputs = [inputs] if self.dense else None
        n_last = len(self.conv_params) - 1
        for i, (w, b) in enumerate(self.conv_params):
            is_block_output = (i == n_last) and not self.dense
            # Intermediate activations stay bf16 (next layer re-casts for
            # patches anyway); only the block output is kept in f32.
            out_dtype = jnp.float32 if is_block_output else jnp.bfloat16
            if self.residual:
                if i == 0 and self.skip_params is not None:
                    # Skip projection is a Conv3DReLU in the original module.
                    identity = conv_fn(inputs, *self.skip_params, leak,
                                       out_dtype=jnp.bfloat16)
                else:
                    identity = inputs
                outputs = conv_fn(inputs, w, b, leak, residual=identity,
                                  out_dtype=out_dtype)          # fused add
            else:
                outputs = conv_fn(inputs, w, b, leak, out_dtype=out_dtype)
            if self.dense:
                all_inputs.append(outputs)
                inputs = jnp.concatenate(all_inputs, axis=1)     # channel concat (glue)
            else:
                inputs = outputs
        if self.dense:
            outputs = conv_fn(inputs, *self.final_params, leak,
                              out_dtype=jnp.float32)
        return outputs

    def __call__(self, x_ncdhw):
        # NCDHW in, NCDHW out — no layout transposes needed anymore.
        return self._forward(x_ncdhw, conv3d_lrelu)

    def reference(self, x_ncdhw):
        return self._forward(x_ncdhw, conv3d_lrelu_ref)


if __name__ == "__main__":
    key = jax.random.PRNGKey(0)
    kx, k1, k2, k3 = jax.random.split(key, 4)

    # Small shapes consistent with Conv3DBlock: N=2, Cin=4, Cout=8, D=H=W=8.
    N, Cin, Cout, D, H, W = 2, 4, 8, 8, 8, 8
    x = jax.random.normal(kx, (N, Cin, D, H, W), jnp.float32)   # NCDHW, like PyTorch

    for bkey, btype in ((k1, "c"), (k2, "r"), (k3, "d")):
        block = Conv3DBlockPallas(
            bkey, n_convs=2, n_channels_in=Cin, n_channels_out=Cout,
            block_type=btype, kernel_size=3, relu_leak=0.1)

        y = jax.block_until_ready(jax.jit(block.__call__)(x))
        assert y.shape == (N, Cout, D, H, W), (btype, y.shape)

        y_ref = jax.block_until_ready(jax.jit(block.reference)(x))
        # bf16 patches/weights/intermediates with f32 accumulation vs an f32
        # reference -> loosened tolerance.
        np.testing.assert_allclose(np.asarray(y), np.asarray(y_ref),
                                   rtol=3e-2, atol=3e-2)

    print("KERNEL_OK")
</pallas_src>

<mosaic_0001>
module attributes {stable_mosaic.version = 11 : i64} {
  func.func @_mm_bias_lrelu_kernel(%arg0: i32, %arg1: i32, %arg2: memref<1x112x256xbf16, #tpu.memory_space<vmem>>, %arg3: memref<8x112xbf16, #tpu.memory_space<vmem>>, %arg4: memref<8x1xf32, #tpu.memory_space<vmem>>, %arg5: memref<1x8x256xbf16, #tpu.memory_space<vmem>>) attributes {dimension_semantics = [#tpu.dimension_semantics<parallel>, #tpu.dimension_semantics<parallel>], iteration_bounds = array<i64: 2, 2>, scalar_prefetch = 0 : i64, scratch_operands = 0 : i64, tpu.core_type = #tpu.core_type<tc>, window_params = [{transform_indices = @transform_0, window_bounds = array<i64: 1, 112, 256>}, {pipeline_mode = #tpu.pipeline_mode<synchronous>, transform_indices = @transform_1, window_bounds = array<i64: 8, 112>}, {pipeline_mode = #tpu.pipeline_mode<synchronous>, transform_indices = @transform_2, window_bounds = array<i64: 8, 1>}, {transform_indices = @transform_3, window_bounds = array<i64: 1, 8, 256>}]} {
    %c0 = arith.constant 0 : index
    %c0_0 = arith.constant 0 : index
    %0 = vector.load %arg3[%c0, %c0_0] : memref<8x112xbf16, #tpu.memory_space<vmem>>, vector<8x112xbf16>
    %c0_1 = arith.constant 0 : index
    %c0_2 = arith.constant 0 : index
    %c0_3 = arith.constant 0 : index
    %1 = vector.load %arg2[%c0_1, %c0_2, %c0_3] : memref<1x112x256xbf16, #tpu.memory_space<vmem>>, vector<1x112x256xbf16>
    %2 = vector.shape_cast %1 : vector<1x112x256xbf16> to vector<112x256xbf16>
    %cst = arith.constant dense<0.000000e+00> : vector<8x256xf32>
    %3 = tpu.matmul %0, %2, %cst {dimension_numbers = #tpu.dot_dimension_numbers<[1], [0], [0], [1], [0, 0, 1, 1], [], []>} : vector<8x112xbf16>, vector<112x256xbf16>, vector<8x256xf32> -> vector<8x256xf32>
    %c0_4 = arith.constant 0 : index
    %c0_5 = arith.constant 0 : index
    %4 = vector.load %arg4[%c0_4, %c0_5] : memref<8x1xf32, #tpu.memory_space<vmem>>, vector<8x1xf32>
    %5 = vector.broadcast %4 : vector<8x1xf32> to vector<8x256xf32>
    %6 = arith.addf %3, %5 : vector<8x256xf32>
    %cst_6 = arith.constant 0.000000e+00 : f32
    %7 = vector.broadcast %cst_6 : f32 to vector<8x256xf32>
    %8 = arith.cmpf oge, %6, %7 : vector<8x256xf32>
    %cst_7 = arith.constant 1.000000e-01 : f32
    %9 = vector.broadcast %cst_7 : f32 to vector<8x256xf32>
    %10 = arith.mulf %9, %6 : vector<8x256xf32>
    %11 = arith.select %8, %6, %10 : vector<8x256xi1>, vector<8x256xf32>
    %12 = arith.truncf %11 : vector<8x256xf32> to vector<8x256xbf16>
    %c0_8 = arith.constant 0 : index
    %c0_9 = arith.constant 0 : index
    %c0_10 = arith.constant 0 : index
    %13 = vector.load %arg5[%c0_8, %c0_9, %c0_10] : memref<1x8x256xbf16, #tpu.memory_space<vmem>>, vector<1x8x256xbf16>
    %14 = vector.shape_cast %13 : vector<1x8x256xbf16> to vector<8x256xbf16>
    %15 = vector.shape_cast %12 : vector<8x256xbf16> to vector<1x8x256xbf16>
    tpu.vector_store %arg5[%c0_8, %c0_9, %c0_10], %15 {strides = array<i32>} : memref<1x8x256xbf16, #tpu.memory_space<vmem>>, vector<1x8x256xbf16>,
    return
  }
  func.func @transform_0(%arg0: i32, %arg1: i32) -> (i32, i32, i32) {
    %c0_i32 = arith.constant 0 : i32
    %c0_i32_0 = arith.constant 0 : i32
    return %arg0, %c0_i32, %arg1 : i32, i32, i32
  }
  func.func @transform_1(%arg0: i32, %arg1: i32) -> (i32, i32) {
    %c0_i32 = arith.constant 0 : i32
    %c0_i32_0 = arith.constant 0 : i32
    %c0_i32_1 = arith.constant 0 : i32
    return %c0_i32, %c0_i32_0 : i32, i32
  }
  func.func @transform_2(%arg0: i32, %arg1: i32) -> (i32, i32) {
    %c0_i32 = arith.constant 0 : i32
    %c0_i32_0 = arith.constant 0 : i32
    %c0_i32_1 = arith.constant 0 : i32
    return %c0_i32, %c0_i32_0 : i32, i32
  }
  func.func @transform_3(%arg0: i32, %arg1: i32) -> (i32, i32, i32) {
    %c0_i32 = arith.constant 0 : i32
    %c0_i32_0 = arith.constant 0 : i32
    return %arg0, %c0_i32, %arg1 : i32, i32, i32
  }
}

module attributes {stable_mosaic.version = 11 : i64} {
  func.func @_mm_bias_lrelu_kernel(%arg0: i32, %arg1: i32, %arg2: memref<1x224x256xbf16, #tpu.memory_space<vmem>>, %arg3: memref<8x224xbf16, #tpu.memory_space<vmem>>, %arg4: memref<8x1xf32, #tpu.memory_space<vmem>>, %arg5: memref<1x8x256xf32, #tpu.memory_space<vmem>>) attributes {dimension_semantics = [#tpu.dimension_semantics<parallel>, #tpu.dimension_semantics<parallel>], iteration_bounds = array<i64: 2, 2>, scalar_prefetch = 0 : i64, scratch_operands = 0 : i64, tpu.core_type = #tpu.core_type<tc>, window_params = [{transform_indices = @transform_0, window_bounds = array<i64: 1, 224, 256>}, {pipeline_mode = #tpu.pipeline_mode<synchronous>, transform_indices = @transform_1, window_bounds = array<i64: 8, 224>}, {pipeline_mode = #tpu.pipeline_mode<synchronous>, transform_indices = @transform_2, window_bounds = array<i64: 8, 1>}, {transform_indices = @transform_3, window_bounds = array<i64: 1, 8, 256>}]} {
    %c0 = arith.constant 0 : index
    %c0_0 = arith.constant 0 : index
    %0 = vector.load %arg3[%c0, %c0_0] : memref<8x224xbf16, #tpu.memory_space<vmem>>, vector<8x224xbf16>
    %c0_1 = arith.constant 0 : index
    %c0_2 = arith.constant 0 : index
    %c0_3 = arith.constant 0 : index
    %1 = vector.load %arg2[%c0_1, %c0_2, %c0_3] : memref<1x224x256xbf16, #tpu.memory_space<vmem>>, vector<1x224x256xbf16>
    %2 = vector.shape_cast %1 : vector<1x224x256xbf16> to vector<224x256xbf16>
    %cst = arith.constant dense<0.000000e+00> : vector<8x256xf32>
    %3 = tpu.matmul %0, %2, %cst {dimension_numbers = #tpu.dot_dimension_numbers<[1], [0], [0], [1], [0, 0, 1, 1], [], []>} : vector<8x224xbf16>, vector<224x256xbf16>, vector<8x256xf32> -> vector<8x256xf32>
    %c0_4 = arith.constant 0 : index
    %c0_5 = arith.constant 0 : index
    %4 = vector.load %arg4[%c0_4, %c0_5] : memref<8x1xf32, #tpu.memory_space<vmem>>, vector<8x1xf32>
    %5 = vector.broadcast %4 : vector<8x1xf32> to vector<8x256xf32>
    %6 = arith.addf %3, %5 : vector<8x256xf32>
    %cst_6 = arith.constant 0.000000e+00 : f32
    %7 = vector.broadcast %cst_6 : f32 to vector<8x256xf32>
    %8 = arith.cmpf oge, %6, %7 : vector<8x256xf32>
    %cst_7 = arith.constant 1.000000e-01 : f32
    %9 = vector.broadcast %cst_7 : f32 to vector<8x256xf32>
    %10 = arith.mulf %9, %6 : vector<8x256xf32>
    %11 = arith.select %8, %6, %10 : vector<8x256xi1>, vector<8x256xf32>
    %c0_8 = arith.constant 0 : index
    %c0_9 = arith.constant 0 : index
    %c0_10 = arith.constant 0 : index
    %12 = vector.load %arg5[%c0_8, %c0_9, %c0_10] : memref<1x8x256xf32, #tpu.memory_space<vmem>>, vector<1x8x256xf32>
    %13 = vector.shape_cast %12 : vector<1x8x256xf32> to vector<8x256xf32>
    %14 = vector.shape_cast %11 : vector<8x256xf32> to vector<1x8x256xf32>
    tpu.vector_store %arg5[%c0_8, %c0_9, %c0_10], %14 {strides = array<i32>} : memref<1x8x256xf32, #tpu.memory_space<vmem>>, vector<1x8x256xf32>,
    return
  }
  func.func @transform_0(%arg0: i32, %arg1: i32) -> (i32, i32, i32) {
    %c0_i32 = arith.constant 0 : i32
    %c0_i32_0 = arith.constant 0 : i32
    return %arg0, %c0_i32, %arg1 : i32, i32, i32
  }
  func.func @transform_1(%arg0: i32, %arg1: i32) -> (i32, i32) {
    %c0_i32 = arith.constant 0 : i32
    %c0_i32_0 = arith.constant 0 : i32
    %c0_i32_1 = arith.constant 0 : i32
    return %c0_i32, %c0_i32_0 : i32, i32
  }
  func.func @transform_2(%arg0: i32, %arg1: i32) -> (i32, i32) {
    %c0_i32 = arith.constant 0 : i32
    %c0_i32_0 = arith.constant 0 : i32
    %c0_i32_1 = arith.constant 0 : i32
    return %c0_i32, %c0_i32_0 : i32, i32
  }
  func.func @transform_3(%arg0: i32, %arg1: i32) -> (i32, i32, i32) {
    %c0_i32 = arith.constant 0 : i32
    %c0_i32_0 = arith.constant 0 : i32
    return %arg0, %c0_i32, %arg1 : i32, i32, i32
  }
}

</mosaic_0001>

<llo_original>
// kernel: a_call__.2
$region0: #{a_call__.2}
  #allocation0 [shape = 'u32[]', space=smem, size = 0x4, offset = 0x4, fixed_abs, tag = 'smem constant byte address 0x4 - core index']
  #allocation1 [shape = 'u32[72,128]{1,0:T(1,128)}', space=vmem, size = 0x9000, scoped, tag = 'internal scratch']
  %s0 = inlined_call_operand.vmem [shape: bf16[2,112,512], index: 0, kind: input, shape index: {}]
  %s1 = inlined_call_operand.vmem [shape: bf16[8,112], index: 1, kind: input, shape index: {}]
  %s2 = inlined_call_operand.vmem [shape: f32[8,1], index: 2, kind: input, shape index: {}]
  %s3 = inlined_call_operand.vmem [shape: bf16[2,8,512], index: 3, kind: output, shape index: {}]
  %s4 = sld [smem:[#allocation0]]
  $region83: #{a_call__.2} parent=0
    _
  %s6 = ssub.s32 1, %s4
  %s7 = scalar_select 0, %s6, %s4
  $region1: #{a_call__.2} parent=0
    #allocation2 [shape = 'u8[114688]{0}', space=vmem, size = 0x1c000, scoped, tag = 'input window, operand 0']
    loop: start=0, step=1, limit=6
    $region2: #{a_call__.2} parent=1 // loop_pre_header
      _
    $region3: #{a_call__.2} parent=1 // loop_header
      %s9 = sphi 0, %s13
      %p10 = scmp.ge.s32.totalorder %s9, 6
      %s16 = sphi 0, %s28
      %s17 = sphi 0, %s24
      %s18 = sphi 0, %s16
      %s19 = sphi 0, %s17
      %s20 = sphi 0, %s18
      %s21 = sphi 0, %s19
      %s33 = sphi 0, %s35
      %s36 = sphi 0, %s33
      %s37 = sphi 0, %s36
      %s53 = sphi 0, %s37
      %s57 = sphi 0, %s57
      %s59 = sphi 0, %s57
      %s60 = sphi 0, %s59
      %s74 = sphi 0, %s60
      %s78 = sphi 0, %s78
      %s80 = sphi 0, %s78
      %s81 = sphi 0, %s80
      %s95 = sphi 0, %s81
      %s103 = sphi 0, %s105
      %s106 = sphi 0, %s103
      %s107 = sphi 0, %s106
      %s123 = sphi 0, %s107
    $region4: #{a_call__.2} parent=1 // loop_header_branch
      %12 = sbr.rel (%p10) target = $region8
    $region5: #{a_call__.2} parent=1 // loop_body
      %s14 = ssub.s32 %s9, 1
      %s15 = ssub.s32 %s9, 2
      %s22 = sadd.s32 1, %s17
      %p23 = scmp.ge.s32.totalorder %s22, 2
      %s24 = scalar_select %p23, 0, %s22
      %s25 = sadd.s32 1, %s16
      %s26 = scalar_select %p23, %s25, %s16
      %p27 = scmp.ge.s32.totalorder %s26, 2
      %s28 = scalar_select %p27, 0, %s26
      %s29 = ssub.s32 %s16, %s28
      %s30 = ssub.s32 %s17, %s24
      %s31 = sor.u32 %s29, %s30
      %p32 = scmp.eq.s32.totalorder %s31, 0
      %s34 = sadd.s32 %s33, 1
      %s35 = scalar_select %p32, %s33, %s34
      %p38 = pneg %p32
      %p39 = scmp.eq.s32.totalorder %s9, 3
      %p40 = por %p38, %p39
      %p41 = scmp.ne.s32.totalorder %s33, %s36
      %p42 = scmp.eq.s32.totalorder %s9, 0
      %p43 = por %p41, %p42
      %p44 = scmp.ne.s32.totalorder %s33, %s36
      %p45 = scmp.eq.s32.totalorder %s14, 3
      %p46 = por %p44, %p45
      %p47 = scmp.ne.s32.totalorder %s36, %s37
      %p48 = scmp.eq.s32.totalorder %s14, 0
      %p49 = por %p47, %p48
      %p50 = scmp.ne.s32.totalorder %s36, %s37
      %p51 = scmp.eq.s32.totalorder %s15, 3
      %p52 = por %p50, %p51
      %p54 = scmp.ne.s32.totalorder %s37, %s53
      %p55 = scmp.eq.s32.totalorder %s15, 0
      %p56 = por %p54, %p55
      %s58 = sadd.s32 %s57, 1
      %p61 = scmp.eq.s32.totalorder %s9, 3
      %p62 = scmp.ne.s32.totalorder %s57, %s59
      %p63 = scmp.eq.s32.totalorder %s9, 0
      %p64 = por %p62, %p63
      %p65 = scmp.ne.s32.totalorder %s57, %s59
      %p66 = scmp.eq.s32.totalorder %s14, 3
      %p67 = por %p65, %p66
      %p68 = scmp.ne.s32.totalorder %s59, %s60
      %p69 = scmp.eq.s32.totalorder %s14, 0
      %p70 = por %p68, %p69
      %p71 = scmp.ne.s32.totalorder %s59, %s60
      %p72 = scmp.eq.s32.totalorder %s15, 3
      %p73 = por %p71, %p72
      %p75 = scmp.ne.s32.totalorder %s60, %s74
      %p76 = scmp.eq.s32.totalorder %s15, 0
      %p77 = por %p75, %p76
      %s79 = sadd.s32 %s78, 1
      %p82 = scmp.eq.s32.totalorder %s9, 3
      %p83 = scmp.ne.s32.totalorder %s78, %s80
      %p84 = scmp.eq.s32.totalorder %s9, 0
      %p85 = por %p83, %p84
      %p86 = scmp.ne.s32.totalorder %s78, %s80
      %p87 = scmp.eq.s32.totalorder %s14, 3
      %p88 = por %p86, %p87
      %p89 = scmp.ne.s32.totalorder %s80, %s81
      %p90 = scmp.eq.s32.totalorder %s14, 0
      %p91 = por %p89, %p90
      %p92 = scmp.ne.s32.totalorder %s80, %s81
      %p93 = scmp.eq.s32.totalorder %s15, 3
      %p94 = por %p92, %p93
      %p96 = scmp.ne.s32.totalorder %s81, %s95
      %p97 = scmp.eq.s32.totalorder %s15, 0
      %p98 = por %p96, %p97
      %s99 = ssub.s32 %s16, %s28
      %s100 = ssub.s32 %s17, %s24
      %s101 = sor.u32 %s99, %s100
      %p102 = scmp.eq.s32.totalorder %s101, 0
      %s104 = sadd.s32 %s103, 1
      %s105 = scalar_select %p102, %s103, %s104
      %p108 = pneg %p102
      %p109 = scmp.eq.s32.totalorder %s9, 3
      %p110 = por %p108, %p109
      %p111 = scmp.ne.s32.totalorder %s103, %s106
      %p112 = scmp.eq.s32.totalorder %s9, 0
      %p113 = por %p111, %p112
      %p114 = scmp.ne.s32.totalorder %s103, %s106
      %p115 = scmp.eq.s32.totalorder %s14, 3
      %p116 = por %p114, %p115
      %p117 = scmp.ne.s32.totalorder %s106, %s107
      %p118 = scmp.eq.s32.totalorder %s14, 0
      %p119 = por %p117, %p118
      %p120 = scmp.ne.s32.totalorder %s106, %s107
      %p121 = scmp.eq.s32.totalorder %s15, 3
      %p122 = por %p120, %p121
      %p124 = scmp.ne.s32.totalorder %s107, %s123
      %p125 = scmp.eq.s32.totalorder %s15, 0
      %p126 = por %p124, %p125
      %p127 = scmp.le.s32.totalorder 1, %s9
      %p128 = scmp.lt.s32.totalorder %s9, 5
      %p129 = pnand %p127, %p128
      %p130 = pneg %p129
      // Predicated region
      $region9: #{a_call__.2} parent=5 // pred_check
        _
      $region10: #{a_call__.2} parent=5 // pred_check_branch
        %132 = sbr.rel (%p129) target = $region12
      $region11: #{a_call__.2} parent=5 // pred_region
        %s133 = ssub.s32 %s9, 1
        // Predicated region
        $region13: #{a_call__.2} parent=11 // pred_check
          %p134 = pneg %p70
        $region14: #{a_call__.2} parent=11 // pred_check_branch
          %136 = sbr.rel (%p134) target = $region16
        $region15: #{a_call__.2} parent=11 // pred_region
          _
        $region16: #{a_call__.2} parent=11 // pred_fallthru
          _
        // Predicated region
        $region17: #{a_call__.2} parent=11 // pred_check
          %p137 = pneg %p91
        $region18: #{a_call__.2} parent=11 // pred_check_branch
          %139 = sbr.rel (%p137) target = $region20
        $region19: #{a_call__.2} parent=11 // pred_region
          _
        $region20: #{a_call__.2} parent=11 // pred_fallthru
          _
      $region12: #{a_call__.2} parent=5 // pred_fallthru
        _
      %p140 = scmp.lt.s32.totalorder %s9, 4
      // Predicated region
      $region21: #{a_call__.2} parent=5 // pred_check
        %p141 = pneg %p140
      $region22: #{a_call__.2} parent=5 // pred_check_branch
        %143 = sbr.rel (%p141) target = $region24
      $region23: #{a_call__.2} parent=5 // pred_region
        // Predicated region
        $region25: #{a_call__.2} parent=23 // pred_check
          %p144 = pneg %p43
        $region26: #{a_call__.2} parent=23 // pred_check_branch
          %146 = sbr.rel (%p144) target = $region28
        $region27: #{a_call__.2} parent=23 // pred_region
          %s147 = sand.u32 %s33, 1
          %s148 = sand.u32 %s33, 1
          %s149 = smul.addr %s148, 112
          %s150 = scalar_lea.vmem [#allocation2], %s149
          %s151 = smul.u32 2, %s17
          %s152 = smul.addr %s16, 56
          %s153 = sadd.s32 %s151, %s152
          %s154 = smul.addr %s153, 4
          %s155 = scalar_lea.vmem %s0, %s154
          // Predicated region
          $region29: #{a_call__.2} parent=27 // pred_check
            _
          $region30: #{a_call__.2} parent=27 // pred_check_branch
            %157 = sbr.rel (0) target = $region32
          $region31: #{a_call__.2} parent=27 // pred_region
            // Predicated region
            $region33: #{a_call__.2} parent=31 // pred_check
              _
            $region34: #{a_call__.2} parent=31 // pred_check_branch
              %159 = sbr.rel (0) target = $region36
            $region35: #{a_call__.2} parent=31 // pred_region
              // Predicated region
              $region48: #{a_call__.2} parent=35 // pred_check
                _
              $region49: #{a_call__.2} parent=35 // pred_check_branch
                %201 = sbr.rel (0) target = $region51
              $region50: #{a_call__.2} parent=35 // pred_region
                loop: start=0, step=1, limit=1
                $region52: #{a_call__.2} parent=50 // loop_pre_header
                  _
                $region53: #{a_call__.2} parent=50 // loop_header
                  %s203 = sphi 0, %s207
                  %p204 = scmp.ge.s32.totalorder %s203, 1
                  %s208 = sphi %s155, %s155
                  %s209 = sphi %s150, %s150
                $region54: #{a_call__.2} parent=50 // loop_header_branch
                  %206 = sbr.rel (%p204) target = $region58
                $region55: #{a_call__.2} parent=50 // loop_body
                  %v210 = vld [vmem:[%s208] sm:$0xff]
                  %211 = vst [vmem:[%s209] sm:$0xff] %v210
                  %v212 = vld [vmem:[%s208 + $0x10] sm:$0xff]
                  %213 = vst [vmem:[%s209 + $0x8] sm:$0xff] %v212
                  %v214 = vld [vmem:[%s208 + $0x20] sm:$0xff]
                  %215 = vst [vmem:[%s209 + $0x10] sm:$0xff] %v214
                  %v216 = vld [vmem:[%s208 + $0x30] sm:$0xff]
                  %217 = vst [vmem:[%s209 + $0x18] sm:$0xff] %v216
                  %v218 = vld [vmem:[%s208 + $0x40] sm:$0xff]
                  %219 = vst [vmem:[%s209 + $0x20] sm:$0xff] %v218
                  %v220 = vld [vmem:[%s208 + $0x50] sm:$0xff]
                  %221 = vst [vmem:[%s209 + $0x28] sm:$0xff] %v220
                  %v222 = vld [vmem:[%s208 + $0x60] sm:$0xff]
                  %223 = vst [vmem:[%s209 + $0x30] sm:$0xff] %v222
                  %v224 = vld [vmem:[%s208 + $0x70] sm:$0xff]
                  %225 = vst [vmem:[%s209 + $0x38] sm:$0xff] %v224
                  %v226 = vld [vmem:[%s208 + $0x80] sm:$0xff]
                  %227 = vst [vmem:[%s209 + $0x40] sm:$0xff] %v226
                  %v228 = vld [vmem:[%s208 + $0x90] sm:$0xff]
                  %229 = vst [vmem:[%s209 + $0x48] sm:$0xff] %v228
                  %v230 = vld [vmem:[%s208 + $0xa0] sm:$0xff]
                  %231 = vst [vmem:[%s209 + $0x50] sm:$0xff] %v230
                  %v232 = vld [vmem:[%s208 + $0xb0] sm:$0xff]
                  %233 = vst [vmem:[%s209 + $0x58] sm:$0xff] %v232
                  %v234 = vld [vmem:[%s208 + $0xc0] sm:$0xff]
                  %235 = vst [vmem:[%s209 + $0x60] sm:$0xff] %v234
                  %v236 = vld [vmem:[%s208 + $0xd0] sm:$0xff]
                  %237 = vst [vmem:[%s209 + $0x68] sm:$0xff] %v236
                $region56: #{a_call__.2} parent=50 // loop_footer
                  %s207 = sadd.s32 1, %s203
                $region57: #{a_call__.2} parent=50 // loop_footer_branch
                  %202 = sbr.rel target = $region53
                $region58: #{a_call__.2} parent=50 // loop_exit
                  _
              $region51: #{a_call__.2} parent=35 // pred_fallthru
                _
              // Predicated region
              $region59: #{a_call__.2} parent=35 // pred_check
                _
              $region60: #{a_call__.2} parent=35 // pred_check_branch
                %239 = sbr.rel target = $region62
              $region61: #{a_call__.2} parent=35 // pred_region
                _
              $region62: #{a_call__.2} parent=35 // pred_fallthru
                _
            $region36: #{a_call__.2} parent=31 // pred_fallthru
              _
            // Predicated region
            $region37: #{a_call__.2} parent=31 // pred_check
              _
            $region38: #{a_call__.2} parent=31 // pred_check_branch
              %161 = sbr.rel target = $region40
            $region39: #{a_call__.2} parent=31 // pred_region
              %s163 = ssub.s32 256, 1
              loop: start=0, step=1, limit=1
              $region41: #{a_call__.2} parent=39 // loop_pre_header
                _
              $region42: #{a_call__.2} parent=39 // loop_header
                %s165 = sphi 0, %s169
                %p166 = scmp.ge.s32.totalorder %s165, 1
                %s170 = sphi %s155, %s155
                %s171 = sphi %s150, %s150
              $region43: #{a_call__.2} parent=39 // loop_header_branch
                %168 = sbr.rel (%p166) target = $region47
              $region44: #{a_call__.2} parent=39 // loop_body
                %v172 = vld [vmem:[%s170] sm:%s163]
                %173 = vst [vmem:[%s171] sm:%s163] %v172
                %v174 = vld [vmem:[%s170 + $0x10] sm:%s163]
                %175 = vst [vmem:[%s171 + $0x8] sm:%s163] %v174
                %v176 = vld [vmem:[%s170 + $0x20] sm:%s163]
                %177 = vst [vmem:[%s171 + $0x10] sm:%s163] %v176
                %v178 = vld [vmem:[%s170 + $0x30] sm:%s163]
                %179 = vst [vmem:[%s171 + $0x18] sm:%s163] %v178
                %v180 = vld [vmem:[%s170 + $0x40] sm:%s163]
                %181 = vst [vmem:[%s171 + $0x20] sm:%s163] %v180
                %v182 = vld [vmem:[%s170 + $0x50] sm:%s163]
                %183 = vst [vmem:[%s171 + $0x28] sm:%s163] %v182
                %v184 = vld [vmem:[%s170 + $0x60] sm:%s163]
                %185 = vst [vmem:[%s171 + $0x30] sm:%s163] %v184
                %v186 = vld [vmem:[%s170 + $0x70] sm:%s163]
                %187 = vst [vmem:[%s171 + $0x38] sm:%s163] %v186
                %v188 = vld [vmem:[%s170 + $0x80] sm:%s163]
                %189 = vst [vmem:[%s171 + $0x40] sm:%s163] %v188
                %v190 = vld [vmem:[%s170 + $0x90] sm:%s163]
                %191 = vst [vmem:[%s171 + $0x48] sm:%s163] %v190
                %v192 = vld [vmem:[%s170 + $0xa0] sm:%s163]
                %193 = vst [vmem:[%s171 + $0x50] sm:%s163] %v192
                %v194 = vld [vmem:[%s170 + $0xb0] sm:%s163]
                %195 = vst [vmem:[%s171 + $0x58] sm:%s163] %v194
                %v196 = vld [vmem:[%s170 + $0xc0] sm:%s163]
                %197 = vst [vmem:[%s171 + $0x60] sm:%s163] %v196
                %v198 = vld [vmem:[%s170 + $0xd0] sm:%s163]
                %199 = vst [vmem:[%s171 + $0x68] sm:%s163] %v198
              $region45: #{a_call__.2} parent=39 // loop_footer
                %s169 = sadd.s32 1, %s165
              $region46: #{a_call__.2} parent=39 // loop_footer_branch
                %164 = sbr.rel target = $region42
              $region47: #{a_call__.2} parent=39 // loop_exit
                _
            $region40: #{a_call__.2} parent=31 // pred_fallthru
              _
          $region32: #{a_call__.2} parent=27 // pred_fallthru
            _
          %240 = vnop
        $region28: #{a_call__.2} parent=23 // pred_fallthru
          _
      $region24: #{a_call__.2} parent=5 // pred_fallthru
        _
      %p241 = scmp.le.s32.totalorder 1, %s9
      %p242 = scmp.lt.s32.totalorder %s9, 5
      %p243 = pnand %p241, %p242
      %p244 = pneg %p243
      // Predicated region
      $region63: #{a_call__.2} parent=5 // pred_check
        _
      $region64: #{a_call__.2} parent=5 // pred_check_branch
        %246 = sbr.rel (%p243) target = $region66
      $region65: #{a_call__.2} parent=5 // pred_region
        %s247 = ssub.s32 %s9, 1
        %s248 = sand.u32 %s36, 1
        %s249 = sand.u32 %s36, 1
        %s250 = smul.addr %s249, 112
        %s251 = scalar_lea.vmem [#allocation2], %s250
        // Predicated region
        $region67: #{a_call__.2} parent=65 // pred_check
          %p252 = pneg %p49
        $region68: #{a_call__.2} parent=65 // pred_check_branch
          %254 = sbr.rel (%p252) target = $region70
        $region69: #{a_call__.2} parent=65 // pred_region
          _
        $region70: #{a_call__.2} parent=65 // pred_fallthru
          _
        %s255 = sand.u32 %s36, 1
        %s256 = sand.u32 %s36, 1
        %s257 = smul.addr %s256, 112
        %s258 = scalar_lea.vmem [#allocation2], %s257
        %p259 = pneg %p49
        %p260 = pneg %p46
        %p261 = pneg %p70
        %p262 = pneg %p67
        %p263 = pneg %p91
        %p264 = pneg %p88
        %p265 = pneg %p119
        %p266 = pneg %p116
        %s267 = smul.u32 2, %s19
        %p268 = scmp.lt.s32.totalorder %s18, 1
        %s269 = scalar_select %p268, %s18, 1
        %p270 = scmp.lt.s32.totalorder %s267, 3
        %s271 = scalar_select %p270, %s267, 3
        %s272 = smul.addr %s269, 4
        %s273 = sadd.s32 %s271, %s272
        %s274 = smul.addr %s273, 4
        %s275 = scalar_lea.vmem %s3, %s274
        %s276 = smul.u32 2, %s19
        %s277 = smul.u32 2, %s19
        %p278 = scmp.lt.s32.totalorder %s18, 1
        %s279 = scalar_select %p278, %s18, 1
        %p280 = scmp.lt.s32.totalorder %s277, 3
        %s281 = scalar_select %p280, %s277, 3
        %s282 = smul.addr %s279, 4
        %s283 = sadd.s32 %s281, %s282
        %s284 = smul.addr %s283, 4
        %s285 = scalar_lea.vmem %s3, %s284
        %s286 = smul.u32 2, %s19
        %v288 = vld [vmem:[%s1] sm:$0xf]
        %v289 = vld [vmem:[%s251] sm:$0xff]
        %v290 = vld [vmem:[%s251 + $0x8] sm:$0xff]
        %v291 = vld [vmem:[%s251 + $0x10] sm:$0xff]
        %v292 = vld [vmem:[%s251 + $0x18] sm:$0xff]
        %v293 = vld [vmem:[%s251 + $0x20] sm:$0xff]
        %v294 = vld [vmem:[%s251 + $0x28] sm:$0xff]
        %v295 = vld [vmem:[%s251 + $0x30] sm:$0xff]
        %v296 = vld [vmem:[%s251 + $0x38] sm:$0xff]
        %v297 = vld [vmem:[%s251 + $0x40] sm:$0xff]
        %v298 = vld [vmem:[%s251 + $0x48] sm:$0xff]
        %v299 = vld [vmem:[%s251 + $0x50] sm:$0xff]
        %v300 = vld [vmem:[%s251 + $0x58] sm:$0xff]
        %v301 = vld [vmem:[%s251 + $0x60] sm:$0xff]
        %v302 = vld [vmem:[%s251 + $0x68] sm:$0xff]
        %v303 = vld [vmem:[%s2] sm:$0xff]
        %305 = vset.pattern.permute.xlu0 0
        %306 = vperm.xlu0 %305, %v303
        %v307 = vpop.permute.xlu0 %306
        %v323 = vunpack.c.l.b16 %v289
        %v324 = vunpack.c.h.b16 %v289
        %v325 = vunpack.c.l.b16 %v290
        %v326 = vunpack.c.h.b16 %v290
        %v327 = vunpack.c.l.b16 %v291
        %v328 = vunpack.c.h.b16 %v291
        %v329 = vunpack.c.l.b16 %v292
        %v330 = vunpack.c.h.b16 %v292
        %v331 = vunpack.c.l.b16 %v293
        %v332 = vunpack.c.h.b16 %v293
        %v333 = vunpack.c.l.b16 %v294
        %v334 = vunpack.c.h.b16 %v294
        %v335 = vunpack.c.l.b16 %v295
        %v336 = vunpack.c.h.b16 %v295
        %v337 = vunpack.c.l.b16 %v296
        %v338 = vunpack.c.h.b16 %v296
        %v339 = vunpack.c.l.b16 %v297
        %v340 = vunpack.c.h.b16 %v297
        %v341 = vunpack.c.l.b16 %v298
        %v342 = vunpack.c.h.b16 %v298
        %v343 = vunpack.c.l.b16 %v299
        %v344 = vunpack.c.h.b16 %v299
        %v345 = vunpack.c.l.b16 %v300
        %v346 = vunpack.c.h.b16 %v300
        %v347 = vunpack.c.l.b16 %v301
        %v348 = vunpack.c.h.b16 %v301
        %v349 = vunpack.c.l.b16 %v302
        %v350 = vunpack.c.h.b16 %v302
        %v351 = vpack.c.b16 %v325, %v323
        %v352 = vpack.c.b16 %v326, %v324
        %v353 = vpack.c.b16 %v329, %v327
        %v354 = vpack.c.b16 %v330, %v328
        %v355 = vpack.c.b16 %v333, %v331
        %v356 = vpack.c.b16 %v334, %v332
        %v357 = vpack.c.b16 %v337, %v335
        %v358 = vpack.c.b16 %v338, %v336
        %v359 = vpack.c.b16 %v341, %v339
        %v360 = vpack.c.b16 %v342, %v340
        %v361 = vpack.c.b16 %v345, %v343
        %v362 = vpack.c.b16 %v346, %v344
        %v363 = vpack.c.b16 %v349, %v347
        %v364 = vpack.c.b16 %v350, %v348
        %vm379 = vcmask 916480
        %v381 = vsel %vm379, %v288, 0
        %383 = vmatpush.bf16.msra.mxu0 0
        %384 = vmatpush.bf16.msra.mxu0 %v363
        %385 = vmatpush.bf16.msra.mxu0 %v361
        %386 = vmatpush.bf16.msra.mxu0 %v359
        %387 = vmatpush.bf16.msra.mxu0 %v357
        %388 = vmatpush.bf16.msra.mxu0 %v355
        %389 = vmatpush.bf16.msra.mxu0 %v353
        %390 = vmatpush.bf16.msra.mxu0 %v351
        %391 = vmatmul.bf16.gmra.mxu0 %v381
        %v392 = vpop.f32.mrf.mxu0
        %v393 = vadd.f32 %v307, %v392
        %v394 = vpop.f32.mrf.mxu0
        %395 = vdwg.mxu0
        %396 = vmatpush.bf16.msra.mxu0 0
        %397 = vmatpush.bf16.msra.mxu0 %v364
        %398 = vmatpush.bf16.msra.mxu0 %v362
        %399 = vmatpush.bf16.msra.mxu0 %v360
        %400 = vmatpush.bf16.msra.mxu0 %v358
        %401 = vmatpush.bf16.msra.mxu0 %v356
        %402 = vmatpush.bf16.msra.mxu0 %v354
        %403 = vmatpush.bf16.msra.mxu0 %v352
        %404 = vmatmul.bf16.gmra.mxu0 %v381
        %v405 = vpop.f32.mrf.mxu0
        %v406 = vadd.f32 %v307, %v405
        %v407 = vpop.f32.mrf.mxu0
        %408 = vdwg.mxu0
        %vm409 = vcmp.ge.f32.partialorder %v393, 0.0
        %vm410 = vcmp.ge.f32.partialorder %v406, 0.0
        %v411 = vmul.f32 %v393, 0.1
        %v412 = vmul.f32 %v406, 0.1
        %v413 = vsel %vm409, %v393, %v411
        %v414 = vsel %vm410, %v406, %v412
        %v415 = vpack.c.bf16 %v414, %v413
        %416 = vst [vmem:[%s285] sm:$0xff] %v415
        %s417 = smul.u32 2, %s19
        %p418 = scmp.lt.s32.totalorder %s18, 1
        %s419 = scalar_select %p418, %s18, 1
        %p420 = scmp.lt.s32.totalorder %s417, 3
        %s421 = scalar_select %p420, %s417, 3
        %s422 = smul.addr %s419, 4
        %s423 = sadd.s32 %s421, %s422
        %s424 = smul.addr %s423, 4
        %s425 = scalar_lea.vmem %s3, %s424
        // Predicated region
        $region71: #{a_call__.2} parent=65 // pred_check
          %p426 = pneg %p116
        $region72: #{a_call__.2} parent=65 // pred_check_branch
          %428 = sbr.rel (%p426) target = $region74
        $region73: #{a_call__.2} parent=65 // pred_region
          %s429 = smul.u32 2, %s19
        $region74: #{a_call__.2} parent=65 // pred_fallthru
          _
      $region66: #{a_call__.2} parent=5 // pred_fallthru
        _
      %p430 = scmp.le.s32.totalorder 2, %s9
      // Predicated region
      $region75: #{a_call__.2} parent=5 // pred_check
        %p431 = pneg %p430
      $region76: #{a_call__.2} parent=5 // pred_check_branch
        %433 = sbr.rel (%p431) target = $region78
      $region77: #{a_call__.2} parent=5 // pred_region
        %s434 = ssub.s32 %s9, 2
        // Predicated region
        $region79: #{a_call__.2} parent=77 // pred_check
          %p435 = pneg %p122
        $region80: #{a_call__.2} parent=77 // pred_check_branch
          %437 = sbr.rel (%p435) target = $region82
        $region81: #{a_call__.2} parent=77 // pred_region
          %s438 = smul.u32 2, %s21
          %p439 = scmp.lt.s32.totalorder %s20, 1
          %s440 = scalar_select %p439, %s20, 1
          %p441 = scmp.lt.s32.totalorder %s438, 3
          %s442 = scalar_select %p441, %s438, 3
          %s443 = smul.addr %s440, 4
          %s444 = sadd.s32 %s442, %s443
          %s445 = smul.addr %s444, 4
          %s446 = scalar_lea.vmem %s3, %s445
        $region82: #{a_call__.2} parent=77 // pred_fallthru
          _
      $region78: #{a_call__.2} parent=5 // pred_fallthru
        _
    $region6: #{a_call__.2} parent=1 // loop_footer
      %s13 = sadd.s32 1, %s9
    $region7: #{a_call__.2} parent=1 // loop_footer_branch
      %8 = sbr.rel target = $region3
    $region8: #{a_call__.2} parent=1 // loop_exit
      _

// kernel: a_call__.3
$region0: #{a_call__.3}
  #allocation0 [shape = 'u32[]', space=smem, size = 0x4, offset = 0x4, fixed_abs, tag = 'smem constant byte address 0x4 - core index']
  #allocation1 [shape = 'u32[72,128]{1,0:T(1,128)}', space=vmem, size = 0x9000, scoped, tag = 'internal scratch']
  %s0 = inlined_call_operand.vmem [shape: bf16[2,224,512], index: 0, kind: input, shape index: {}]
  %s1 = inlined_call_operand.vmem [shape: bf16[8,224], index: 1, kind: input, shape index: {}]
  %s2 = inlined_call_operand.vmem [shape: f32[8,1], index: 2, kind: input, shape index: {}]
  %s3 = inlined_call_operand.vmem [shape: f32[2,8,512], index: 3, kind: output, shape index: {}]
  %s4 = sld [smem:[#allocation0]]
  $region83: #{a_call__.3} parent=0
    _
  %s6 = ssub.s32 1, %s4
  %s7 = scalar_select 0, %s6, %s4
  $region1: #{a_call__.3} parent=0
    #allocation2 [shape = 'u8[229376]{0}', space=vmem, size = 0x38000, scoped, tag = 'input window, operand 0']
    loop: start=0, step=1, limit=6
    $region2: #{a_call__.3} parent=1 // loop_pre_header
      _
    $region3: #{a_call__.3} parent=1 // loop_header
      %s9 = sphi 0, %s13
      %p10 = scmp.ge.s32.totalorder %s9, 6
      %s16 = sphi 0, %s28
      %s17 = sphi 0, %s24
      %s18 = sphi 0, %s16
      %s19 = sphi 0, %s17
      %s20 = sphi 0, %s18
      %s21 = sphi 0, %s19
      %s33 = sphi 0, %s35
      %s36 = sphi 0, %s33
      %s37 = sphi 0, %s36
      %s53 = sphi 0, %s37
      %s57 = sphi 0, %s57
      %s59 = sphi 0, %s57
      %s60 = sphi 0, %s59
      %s74 = sphi 0, %s60
      %s78 = sphi 0, %s78
      %s80 = sphi 0, %s78
      %s81 = sphi 0, %s80
      %s95 = sphi 0, %s81
      %s103 = sphi 0, %s105
      %s106 = sphi 0, %s103
      %s107 = sphi 0, %s106
      %s123 = sphi 0, %s107
    $region4: #{a_call__.3} parent=1 // loop_header_branch
      %12 = sbr.rel (%p10) target = $region8
    $region5: #{a_call__.3} parent=1 // loop_body
      %s14 = ssub.s32 %s9, 1
      %s15 = ssub.s32 %s9, 2
      %s22 = sadd.s32 1, %s17
      %p23 = scmp.ge.s32.totalorder %s22, 2
      %s24 = scalar_select %p23, 0, %s22
      %s25 = sadd.s32 1, %s16
      %s26 = scalar_select %p23, %s25, %s16
      %p27 = scmp.ge.s32.totalorder %s26, 2
      %s28 = scalar_select %p27, 0, %s26
      %s29 = ssub.s32 %s16, %s28
      %s30 = ssub.s32 %s17, %s24
      %s31 = sor.u32 %s29, %s30
      %p32 = scmp.eq.s32.totalorder %s31, 0
      %s34 = sadd.s32 %s33, 1
      %s35 = scalar_select %p32, %s33, %s34
      %p38 = pneg %p32
      %p39 = scmp.eq.s32.totalorder %s9, 3
      %p40 = por %p38, %p39
      %p41 = scmp.ne.s32.totalorder %s33, %s36
      %p42 = scmp.eq.s32.totalorder %s9, 0
      %p43 = por %p41, %p42
      %p44 = scmp.ne.s32.totalorder %s33, %s36
      %p45 = scmp.eq.s32.totalorder %s14, 3
      %p46 = por %p44, %p45
      %p47 = scmp.ne.s32.totalorder %s36, %s37
      %p48 = scmp.eq.s32.totalorder %s14, 0
      %p49 = por %p47, %p48
      %p50 = scmp.ne.s32.totalorder %s36, %s37
      %p51 = scmp.eq.s32.totalorder %s15, 3
      %p52 = por %p50, %p51
      %p54 = scmp.ne.s32.totalorder %s37, %s53
      %p55 = scmp.eq.s32.totalorder %s15, 0
      %p56 = por %p54, %p55
      %s58 = sadd.s32 %s57, 1
      %p61 = scmp.eq.s32.totalorder %s9, 3
      %p62 = scmp.ne.s32.totalorder %s57, %s59
      %p63 = scmp.eq.s32.totalorder %s9, 0
      %p64 = por %p62, %p63
      %p65 = scmp.ne.s32.totalorder %s57, %s59
      %p66 = scmp.eq.s32.totalorder %s14, 3
      %p67 = por %p65, %p66
      %p68 = scmp.ne.s32.totalorder %s59, %s60
      %p69 = scmp.eq.s32.totalorder %s14, 0
      %p70 = por %p68, %p69
      %p71 = scmp.ne.s32.totalorder %s59, %s60
      %p72 = scmp.eq.s32.totalorder %s15, 3
      %p73 = por %p71, %p72
      %p75 = scmp.ne.s32.totalorder %s60, %s74
      %p76 = scmp.eq.s32.totalorder %s15, 0
      %p77 = por %p75, %p76
      %s79 = sadd.s32 %s78, 1
      %p82 = scmp.eq.s32.totalorder %s9, 3
      %p83 = scmp.ne.s32.totalorder %s78, %s80
      %p84 = scmp.eq.s32.totalorder %s9, 0
      %p85 = por %p83, %p84
      %p86 = scmp.ne.s32.totalorder %s78, %s80
      %p87 = scmp.eq.s32.totalorder %s14, 3
      %p88 = por %p86, %p87
      %p89 = scmp.ne.s32.totalorder %s80, %s81
      %p90 = scmp.eq.s32.totalorder %s14, 0
      %p91 = por %p89, %p90
      %p92 = scmp.ne.s32.totalorder %s80, %s81
      %p93 = scmp.eq.s32.totalorder %s15, 3
      %p94 = por %p92, %p93
      %p96 = scmp.ne.s32.totalorder %s81, %s95
      %p97 = scmp.eq.s32.totalorder %s15, 0
      %p98 = por %p96, %p97
      %s99 = ssub.s32 %s16, %s28
      %s100 = ssub.s32 %s17, %s24
      %s101 = sor.u32 %s99, %s100
      %p102 = scmp.eq.s32.totalorder %s101, 0
      %s104 = sadd.s32 %s103, 1
      %s105 = scalar_select %p102, %s103, %s104
      %p108 = pneg %p102
      %p109 = scmp.eq.s32.totalorder %s9, 3
      %p110 = por %p108, %p109
      %p111 = scmp.ne.s32.totalorder %s103, %s106
      %p112 = scmp.eq.s32.totalorder %s9, 0
      %p113 = por %p111, %p112
      %p114 = scmp.ne.s32.totalorder %s103, %s106
      %p115 = scmp.eq.s32.totalorder %s14, 3
      %p116 = por %p114, %p115
      %p117 = scmp.ne.s32.totalorder %s106, %s107
      %p118 = scmp.eq.s32.totalorder %s14, 0
      %p119 = por %p117, %p118
      %p120 = scmp.ne.s32.totalorder %s106, %s107
      %p121 = scmp.eq.s32.totalorder %s15, 3
      %p122 = por %p120, %p121
      %p124 = scmp.ne.s32.totalorder %s107, %s123
      %p125 = scmp.eq.s32.totalorder %s15, 0
      %p126 = por %p124, %p125
      %p127 = scmp.le.s32.totalorder 1, %s9
      %p128 = scmp.lt.s32.totalorder %s9, 5
      %p129 = pnand %p127, %p128
      %p130 = pneg %p129
      // Predicated region
      $region9: #{a_call__.3} parent=5 // pred_check
        _
      $region10: #{a_call__.3} parent=5 // pred_check_branch
        %132 = sbr.rel (%p129) target = $region12
      $region11: #{a_call__.3} parent=5 // pred_region
        %s133 = ssub.s32 %s9, 1
        // Predicated region
        $region13: #{a_call__.3} parent=11 // pred_check
          %p134 = pneg %p70
        $region14: #{a_call__.3} parent=11 // pred_check_branch
          %136 = sbr.rel (%p134) target = $region16
        $region15: #{a_call__.3} parent=11 // pred_region
          _
        $region16: #{a_call__.3} parent=11 // pred_fallthru
          _
        // Predicated region
        $region17: #{a_call__.3} parent=11 // pred_check
          %p137 = pneg %p91
        $region18: #{a_call__.3} parent=11 // pred_check_branch
          %139 = sbr.rel (%p137) target = $region20
        $region19: #{a_call__.3} parent=11 // pred_region
          _
        $region20: #{a_call__.3} parent=11 // pred_fallthru
          _
      $region12: #{a_call__.3} parent=5 // pred_fallthru
        _
      %p140 = scmp.lt.s32.totalorder %s9, 4
      // Predicated region
      $region21: #{a_call__.3} parent=5 // pred_check
        %p141 = pneg %p140
      $region22: #{a_call__.3} parent=5 // pred_check_branch
        %143 = sbr.rel (%p141) target = $region24
      $region23: #{a_call__.3} parent=5 // pred_region
        // Predicated region
        $region25: #{a_call__.3} parent=23 // pred_check
          %p144 = pneg %p43
        $region26: #{a_call__.3} parent=23 // pred_check_branch
          %146 = sbr.rel (%p144) target = $region28
        $region27: #{a_call__.3} parent=23 // pred_region
          %s147 = sand.u32 %s33, 1
          %s148 = sand.u32 %s33, 1
          %s149 = smul.addr %s148, 224
          %s150 = scalar_lea.vmem [#allocation2], %s149
          %s151 = smul.u32 2, %s17
          %s152 = smul.addr %s16, 112
          %s153 = sadd.s32 %s151, %s152
          %s154 = smul.addr %s153, 4
          %s155 = scalar_lea.vmem %s0, %s154
          // Predicated region
          $region29: #{a_call__.3} parent=27 // pred_check
            _
          $region30: #{a_call__.3} parent=27 // pred_check_branch
            %157 = sbr.rel (0) target = $region32
          $region31: #{a_call__.3} parent=27 // pred_region
            // Predicated region
            $region33: #{a_call__.3} parent=31 // pred_check
              _
            $region34: #{a_call__.3} parent=31 // pred_check_branch
              %159 = sbr.rel (0) target = $region36
            $region35: #{a_call__.3} parent=31 // pred_region
              // Predicated region
              $region48: #{a_call__.3} parent=35 // pred_check
                _
              $region49: #{a_call__.3} parent=35 // pred_check_branch
                %229 = sbr.rel (0) target = $region51
              $region50: #{a_call__.3} parent=35 // pred_region
                loop: start=0, step=1, limit=1
                $region52: #{a_call__.3} parent=50 // loop_pre_header
                  _
                $region53: #{a_call__.3} parent=50 // loop_header
                  %s231 = sphi 0, %s235
                  %p232 = scmp.ge.s32.totalorder %s231, 1
                  %s236 = sphi %s155, %s155
                  %s237 = sphi %s150, %s150
                $region54: #{a_call__.3} parent=50 // loop_header_branch
                  %234 = sbr.rel (%p232) target = $region58
                $region55: #{a_call__.3} parent=50 // loop_body
                  %v238 = vld [vmem:[%s236] sm:$0xff]
                  %239 = vst [vmem:[%s237] sm:$0xff] %v238
                  %v240 = vld [vmem:[%s236 + $0x10] sm:$0xff]
                  %241 = vst [vmem:[%s237 + $0x8] sm:$0xff] %v240
                  %v242 = vld [vmem:[%s236 + $0x20] sm:$0xff]
                  %243 = vst [vmem:[%s237 + $0x10] sm:$0xff] %v242
                  %v244 = vld [vmem:[%s236 + $0x30] sm:$0xff]
                  %245 = vst [vmem:[%s237 + $0x18] sm:$0xff] %v244
                  %v246 = vld [vmem:[%s236 + $0x40] sm:$0xff]
                  %247 = vst [vmem:[%s237 + $0x20] sm:$0xff] %v246
                  %v248 = vld [vmem:[%s236 + $0x50] sm:$0xff]
                  %249 = vst [vmem:[%s237 + $0x28] sm:$0xff] %v248
                  %v250 = vld [vmem:[%s236 + $0x60] sm:$0xff]
                  %251 = vst [vmem:[%s237 + $0x30] sm:$0xff] %v250
                  %v252 = vld [vmem:[%s236 + $0x70] sm:$0xff]
                  %253 = vst [vmem:[%s237 + $0x38] sm:$0xff] %v252
                  %v254 = vld [vmem:[%s236 + $0x80] sm:$0xff]
                  %255 = vst [vmem:[%s237 + $0x40] sm:$0xff] %v254
                  %v256 = vld [vmem:[%s236 + $0x90] sm:$0xff]
                  %257 = vst [vmem:[%s237 + $0x48] sm:$0xff] %v256
                  %v258 = vld [vmem:[%s236 + $0xa0] sm:$0xff]
                  %259 = vst [vmem:[%s237 + $0x50] sm:$0xff] %v258
                  %v260 = vld [vmem:[%s236 + $0xb0] sm:$0xff]
                  %261 = vst [vmem:[%s237 + $0x58] sm:$0xff] %v260
                  %v262 = vld [vmem:[%s236 + $0xc0] sm:$0xff]
                  %263 = vst [vmem:[%s237 + $0x60] sm:$0xff] %v262
                  %v264 = vld [vmem:[%s236 + $0xd0] sm:$0xff]
                  %265 = vst [vmem:[%s237 + $0x68] sm:$0xff] %v264
                  %v266 = vld [vmem:[%s236 + $0xe0] sm:$0xff]
                  %267 = vst [vmem:[%s237 + $0x70] sm:$0xff] %v266
                  %v268 = vld [vmem:[%s236 + $0xf0] sm:$0xff]
                  %269 = vst [vmem:[%s237 + $0x78] sm:$0xff] %v268
                  %v270 = vld [vmem:[%s236 + $0x100] sm:$0xff]
                  %271 = vst [vmem:[%s237 + $0x80] sm:$0xff] %v270
                  %v272 = vld [vmem:[%s236 + $0x110] sm:$0xff]
                  %273 = vst [vmem:[%s237 + $0x88] sm:$0xff] %v272
                  %v274 = vld [vmem:[%s236 + $0x120] sm:$0xff]
                  %275 = vst [vmem:[%s237 + $0x90] sm:$0xff] %v274
                  %v276 = vld [vmem:[%s236 + $0x130] sm:$0xff]
                  %277 = vst [vmem:[%s237 + $0x98] sm:$0xff] %v276
                  %v278 = vld [vmem:[%s236 + $0x140] sm:$0xff]
                  %279 = vst [vmem:[%s237 + $0xa0] sm:$0xff] %v278
                  %v280 = vld [vmem:[%s236 + $0x150] sm:$0xff]
                  %281 = vst [vmem:[%s237 + $0xa8] sm:$0xff] %v280
                  %v282 = vld [vmem:[%s236 + $0x160] sm:$0xff]
                  %283 = vst [vmem:[%s237 + $0xb0] sm:$0xff] %v282
                  %v284 = vld [vmem:[%s236 + $0x170] sm:$0xff]
                  %285 = vst [vmem:[%s237 + $0xb8] sm:$0xff] %v284
                  %v286 = vld [vmem:[%s236 + $0x180] sm:$0xff]
                  %287 = vst [vmem:[%s237 + $0xc0] sm:$0xff] %v286
                  %v288 = vld [vmem:[%s236 + $0x190] sm:$0xff]
                  %289 = vst [vmem:[%s237 + $0xc8] sm:$0xff] %v288
                  %v290 = vld [vmem:[%s236 + $0x1a0] sm:$0xff]
                  %291 = vst [vmem:[%s237 + $0xd0] sm:$0xff] %v290
                  %v292 = vld [vmem:[%s236 + $0x1b0] sm:$0xff]
                  %293 = vst [vmem:[%s237 + $0xd8] sm:$0xff] %v292
                $region56: #{a_call__.3} parent=50 // loop_footer
                  %s235 = sadd.s32 1, %s231
                $region57: #{a_call__.3} parent=50 // loop_footer_branch
                  %230 = sbr.rel target = $region53
                $region58: #{a_call__.3} parent=50 // loop_exit
                  _
              $region51: #{a_call__.3} parent=35 // pred_fallthru
                _
              // Predicated region
              $region59: #{a_call__.3} parent=35 // pred_check
                _
              $region60: #{a_call__.3} parent=35 // pred_check_branch
                %295 = sbr.rel target = $region62
              $region61: #{a_call__.3} parent=35 // pred_region
                _
              $region62: #{a_call__.3} parent=35 // pred_fallthru
                _
            $region36: #{a_call__.3} parent=31 // pred_fallthru
              _
            // Predicated region
            $region37: #{a_call__.3} parent=31 // pred_check
              _
            $region38: #{a_call__.3} parent=31 // pred_check_branch
              %161 = sbr.rel target = $region40
            $region39: #{a_call__.3} parent=31 // pred_region
              %s163 = ssub.s32 256, 1
              loop: start=0, step=1, limit=1
              $region41: #{a_call__.3} parent=39 // loop_pre_header
                _
              $region42: #{a_call__.3} parent=39 // loop_header
                %s165 = sphi 0, %s169
                %p166 = scmp.ge.s32.totalorder %s165, 1
                %s170 = sphi %s155, %s155
                %s171 = sphi %s150, %s150
              $region43: #{a_call__.3} parent=39 // loop_header_branch
                %168 = sbr.rel (%p166) target = $region47
              $region44: #{a_call__.3} parent=39 // loop_body
                %v172 = vld [vmem:[%s170] sm:%s163]
                %173 = vst [vmem:[%s171] sm:%s163] %v172
                %v174 = vld [vmem:[%s170 + $0x10] sm:%s163]
                %175 = vst [vmem:[%s171 + $0x8] sm:%s163] %v174
                %v176 = vld [vmem:[%s170 + $0x20] sm:%s163]
                %177 = vst [vmem:[%s171 + $0x10] sm:%s163] %v176
                %v178 = vld [vmem:[%s170 + $0x30] sm:%s163]
                %179 = vst [vmem:[%s171 + $0x18] sm:%s163] %v178
                %v180 = vld [vmem:[%s170 + $0x40] sm:%s163]
                %181 = vst [vmem:[%s171 + $0x20] sm:%s163] %v180
                %v182 = vld [vmem:[%s170 + $0x50] sm:%s163]
                %183 = vst [vmem:[%s171 + $0x28] sm:%s163] %v182
                %v184 = vld [vmem:[%s170 + $0x60] sm:%s163]
                %185 = vst [vmem:[%s171 + $0x30] sm:%s163] %v184
                %v186 = vld [vmem:[%s170 + $0x70] sm:%s163]
                %187 = vst [vmem:[%s171 + $0x38] sm:%s163] %v186
                %v188 = vld [vmem:[%s170 + $0x80] sm:%s163]
                %189 = vst [vmem:[%s171 + $0x40] sm:%s163] %v188
                %v190 = vld [vmem:[%s170 + $0x90] sm:%s163]
                %191 = vst [vmem:[%s171 + $0x48] sm:%s163] %v190
                %v192 = vld [vmem:[%s170 + $0xa0] sm:%s163]
                %193 = vst [vmem:[%s171 + $0x50] sm:%s163] %v192
                %v194 = vld [vmem:[%s170 + $0xb0] sm:%s163]
                %195 = vst [vmem:[%s171 + $0x58] sm:%s163] %v194
                %v196 = vld [vmem:[%s170 + $0xc0] sm:%s163]
                %197 = vst [vmem:[%s171 + $0x60] sm:%s163] %v196
                %v198 = vld [vmem:[%s170 + $0xd0] sm:%s163]
                %199 = vst [vmem:[%s171 + $0x68] sm:%s163] %v198
                %v200 = vld [vmem:[%s170 + $0xe0] sm:%s163]
                %201 = vst [vmem:[%s171 + $0x70] sm:%s163] %v200
                %v202 = vld [vmem:[%s170 + $0xf0] sm:%s163]
                %203 = vst [vmem:[%s171 + $0x78] sm:%s163] %v202
                %v204 = vld [vmem:[%s170 + $0x100] sm:%s163]
                %205 = vst [vmem:[%s171 + $0x80] sm:%s163] %v204
                %v206 = vld [vmem:[%s170 + $0x110] sm:%s163]
                %207 = vst [vmem:[%s171 + $0x88] sm:%s163] %v206
                %v208 = vld [vmem:[%s170 + $0x120] sm:%s163]
                %209 = vst [vmem:[%s171 + $0x90] sm:%s163] %v208
                %v210 = vld [vmem:[%s170 + $0x130] sm:%s163]
                %211 = vst [vmem:[%s171 + $0x98] sm:%s163] %v210
                %v212 = vld [vmem:[%s170 + $0x140] sm:%s163]
                %213 = vst [vmem:[%s171 + $0xa0] sm:%s163] %v212
                %v214 = vld [vmem:[%s170 + $0x150] sm:%s163]
                %215 = vst [vmem:[%s171 + $0xa8] sm:%s163] %v214
                %v216 = vld [vmem:[%s170 + $0x160] sm:%s163]
                %217 = vst [vmem:[%s171 + $0xb0] sm:%s163] %v216
                %v218 = vld [vmem:[%s170 + $0x170] sm:%s163]
                %219 = vst [vmem:[%s171 + $0xb8] sm:%s163] %v218
                %v220 = vld [vmem:[%s170 + $0x180] sm:%s163]
                %221 = vst [vmem:[%s171 + $0xc0] sm:%s163] %v220
                %v222 = vld [vmem:[%s170 + $0x190] sm:%s163]
                %223 = vst [vmem:[%s171 + $0xc8] sm:%s163] %v222
                %v224 = vld [vmem:[%s170 + $0x1a0] sm:%s163]
                %225 = vst [vmem:[%s171 + $0xd0] sm:%s163] %v224
                %v226 = vld [vmem:[%s170 + $0x1b0] sm:%s163]
                %227 = vst [vmem:[%s171 + $0xd8] sm:%s163] %v226
              $region45: #{a_call__.3} parent=39 // loop_footer
                %s169 = sadd.s32 1, %s165
              $region46: #{a_call__.3} parent=39 // loop_footer_branch
                %164 = sbr.rel target = $region42
              $region47: #{a_call__.3} parent=39 // loop_exit
                _
            $region40: #{a_call__.3} parent=31 // pred_fallthru
              _
          $region32: #{a_call__.3} parent=27 // pred_fallthru
            _
          %296 = vnop
        $region28: #{a_call__.3} parent=23 // pred_fallthru
          _
      $region24: #{a_call__.3} parent=5 // pred_fallthru
        _
      %p297 = scmp.le.s32.totalorder 1, %s9
      %p298 = scmp.lt.s32.totalorder %s9, 5
      %p299 = pnand %p297, %p298
      %p300 = pneg %p299
      // Predicated region
      $region63: #{a_call__.3} parent=5 // pred_check
        _
      $region64: #{a_call__.3} parent=5 // pred_check_branch
        %302 = sbr.rel (%p299) target = $region66
      $region65: #{a_call__.3} parent=5 // pred_region
        %s303 = ssub.s32 %s9, 1
        %s304 = sand.u32 %s36, 1
        %s305 = sand.u32 %s36, 1
        %s306 = smul.addr %s305, 224
        %s307 = scalar_lea.vmem [#allocation2], %s306
        // Predicated region
        $region67: #{a_call__.3} parent=65 // pred_check
          %p308 = pneg %p49
        $region68: #{a_call__.3} parent=65 // pred_check_branch
          %310 = sbr.rel (%p308) target = $region70
        $region69: #{a_call__.3} parent=65 // pred_region
          _
        $region70: #{a_call__.3} parent=65 // pred_fallthru
          _
        %s311 = sand.u32 %s36, 1
        %s312 = sand.u32 %s36, 1
        %s313 = smul.addr %s312, 224
        %s314 = scalar_lea.vmem [#allocation2], %s313
        %p315 = pneg %p49
        %p316 = pneg %p46
        %p317 = pneg %p70
        %p318 = pneg %p67
        %p319 = pneg %p91
        %p320 = pneg %p88
        %p321 = pneg %p119
        %p322 = pneg %p116
        %s323 = smul.u32 2, %s19
        %p324 = scmp.lt.s32.totalorder %s18, 1
        %s325 = scalar_select %p324, %s18, 1
        %p326 = scmp.lt.s32.totalorder %s323, 3
        %s327 = scalar_select %p326, %s323, 3
        %s328 = smul.addr %s325, 4
        %s329 = sadd.s32 %s327, %s328
        %s330 = smul.addr %s329, 8
        %s331 = scalar_lea.vmem %s3, %s330
        %s332 = smul.u32 2, %s19
        %s333 = smul.u32 2, %s19
        %p334 = scmp.lt.s32.totalorder %s18, 1
        %s335 = scalar_select %p334, %s18, 1
        %p336 = scmp.lt.s32.totalorder %s333, 3
        %s337 = scalar_select %p336, %s333, 3
        %s338 = smul.addr %s335, 4
        %s339 = sadd.s32 %s337, %s338
        %s340 = smul.addr %s339, 8
        %s341 = scalar_lea.vmem %s3, %s340
        %s342 = smul.u32 2, %s19
        %v344 = vld [vmem:[%s1] sm:$0xff]
        %v345 = vld [vmem:[%s307] sm:$0xff]
        %v346 = vld [vmem:[%s307 + $0x8] sm:$0xff]
        %v347 = vld [vmem:[%s307 + $0x10] sm:$0xff]
        %v348 = vld [vmem:[%s307 + $0x18] sm:$0xff]
        %v349 = vld [vmem:[%s307 + $0x20] sm:$0xff]
        %v350 = vld [vmem:[%s307 + $0x28] sm:$0xff]
        %v351 = vld [vmem:[%s307 + $0x30] sm:$0xff]
        %v352 = vld [vmem:[%s307 + $0x38] sm:$0xff]
        %v353 = vld [vmem:[%s307 + $0x40] sm:$0xff]
        %v354 = vld [vmem:[%s307 + $0x48] sm:$0xff]
        %v355 = vld [vmem:[%s307 + $0x50] sm:$0xff]
        %v356 = vld [vmem:[%s307 + $0x58] sm:$0xff]
        %v357 = vld [vmem:[%s307 + $0x60] sm:$0xff]
        %v358 = vld [vmem:[%s307 + $0x68] sm:$0xff]
        %v359 = vld [vmem:[%s307 + $0x70] sm:$0xff]
        %v360 = vld [vmem:[%s307 + $0x78] sm:$0xff]
        %v361 = vld [vmem:[%s307 + $0x80] sm:$0xff]
        %v362 = vld [vmem:[%s307 + $0x88] sm:$0xff]
        %v363 = vld [vmem:[%s307 + $0x90] sm:$0xff]
        %v364 = vld [vmem:[%s307 + $0x98] sm:$0xff]
        %v365 = vld [vmem:[%s307 + $0xa0] sm:$0xff]
        %v366 = vld [vmem:[%s307 + $0xa8] sm:$0xff]
        %v367 = vld [vmem:[%s307 + $0xb0] sm:$0xff]
        %v368 = vld [vmem:[%s307 + $0xb8] sm:$0xff]
        %v369 = vld [vmem:[%s307 + $0xc0] sm:$0xff]
        %v370 = vld [vmem:[%s307 + $0xc8] sm:$0xff]
        %v371 = vld [vmem:[%s307 + $0xd0] sm:$0xff]
        %v372 = vld [vmem:[%s307 + $0xd8] sm:$0xff]
        %v373 = vld [vmem:[%s2] sm:$0xff]
        %375 = vset.pattern.permute.xlu0 0
        %376 = vperm.xlu0 %375, %v373
        %v377 = vpop.permute.xlu0 %376
        %v380 = vunpack.c.l.b16 %v344
        %v381 = vunpack.c.h.b16 %v344
        %v382 = vpack.c.b16 %v380, %v380
        %v383 = vpack.c.b16 %v381, %v381
        %v413 = vunpack.c.l.b16 %v345
        %v414 = vunpack.c.h.b16 %v345
        %v415 = vunpack.c.l.b16 %v346
        %v416 = vunpack.c.h.b16 %v346
        %v417 = vunpack.c.l.b16 %v347
        %v418 = vunpack.c.h.b16 %v347
        %v419 = vunpack.c.l.b16 %v348
        %v420 = vunpack.c.h.b16 %v348
        %v421 = vunpack.c.l.b16 %v349
        %v422 = vunpack.c.h.b16 %v349
        %v423 = vunpack.c.l.b16 %v350
        %v424 = vunpack.c.h.b16 %v350
        %v425 = vunpack.c.l.b16 %v351
        %v426 = vunpack.c.h.b16 %v351
        %v427 = vunpack.c.l.b16 %v352
        %v428 = vunpack.c.h.b16 %v352
        %v429 = vunpack.c.l.b16 %v353
        %v430 = vunpack.c.h.b16 %v353
        %v431 = vunpack.c.l.b16 %v354
        %v432 = vunpack.c.h.b16 %v354
        %v433 = vunpack.c.l.b16 %v355
        %v434 = vunpack.c.h.b16 %v355
        %v435 = vunpack.c.l.b16 %v356
        %v436 = vunpack.c.h.b16 %v356
        %v437 = vunpack.c.l.b16 %v357
        %v438 = vunpack.c.h.b16 %v357
        %v439 = vunpack.c.l.b16 %v358
        %v440 = vunpack.c.h.b16 %v358
        %v441 = vunpack.c.l.b16 %v359
        %v442 = vunpack.c.h.b16 %v359
        %v443 = vunpack.c.l.b16 %v360
        %v444 = vunpack.c.h.b16 %v360
        %v445 = vunpack.c.l.b16 %v361
        %v446 = vunpack.c.h.b16 %v361
        %v447 = vunpack.c.l.b16 %v362
        %v448 = vunpack.c.h.b16 %v362
        %v449 = vunpack.c.l.b16 %v363
        %v450 = vunpack.c.h.b16 %v363
        %v451 = vunpack.c.l.b16 %v364
        %v452 = vunpack.c.h.b16 %v364
        %v453 = vunpack.c.l.b16 %v365
        %v454 = vunpack.c.h.b16 %v365
        %v455 = vunpack.c.l.b16 %v366
        %v456 = vunpack.c.h.b16 %v366
        %v457 = vunpack.c.l.b16 %v367
        %v458 = vunpack.c.h.b16 %v367
        %v459 = vunpack.c.l.b16 %v368
        %v460 = vunpack.c.h.b16 %v368
        %v461 = vunpack.c.l.b16 %v369
        %v462 = vunpack.c.h.b16 %v369
        %v463 = vunpack.c.l.b16 %v370
        %v464 = vunpack.c.h.b16 %v370
        %v465 = vunpack.c.l.b16 %v371
        %v466 = vunpack.c.h.b16 %v371
        %v467 = vunpack.c.l.b16 %v372
        %v468 = vunpack.c.h.b16 %v372
        %v469 = vpack.c.b16 %v415, %v413
        %v470 = vpack.c.b16 %v416, %v414
        %v471 = vpack.c.b16 %v419, %v417
        %v472 = vpack.c.b16 %v420, %v418
        %v473 = vpack.c.b16 %v423, %v421
        %v474 = vpack.c.b16 %v424, %v422
        %v475 = vpack.c.b16 %v427, %v425
        %v476 = vpack.c.b16 %v428, %v426
        %v477 = vpack.c.b16 %v431, %v429
        %v478 = vpack.c.b16 %v432, %v430
        %v479 = vpack.c.b16 %v435, %v433
        %v480 = vpack.c.b16 %v436, %v434
        %v481 = vpack.c.b16 %v439, %v437
        %v482 = vpack.c.b16 %v440, %v438
        %v483 = vpack.c.b16 %v443, %v441
        %v484 = vpack.c.b16 %v444, %v442
        %v485 = vpack.c.b16 %v447, %v445
        %v486 = vpack.c.b16 %v448, %v446
        %v487 = vpack.c.b16 %v451, %v449
        %v488 = vpack.c.b16 %v452, %v450
        %v489 = vpack.c.b16 %v455, %v453
        %v490 = vpack.c.b16 %v456, %v454
        %v491 = vpack.c.b16 %v459, %v457
        %v492 = vpack.c.b16 %v460, %v458
        %v493 = vpack.c.b16 %v463, %v461
        %v494 = vpack.c.b16 %v464, %v462
        %v495 = vpack.c.b16 %v467, %v465
        %v496 = vpack.c.b16 %v468, %v466
        %vm525 = vcmask 785408
        %v527 = vsel %vm525, %v383, 0
        %529 = vmatpush.bf16.msra.mxu0 %v483
        %530 = vmatpush.bf16.msra.mxu0 %v481
        %531 = vmatpush.bf16.msra.mxu0 %v479
        %532 = vmatpush.bf16.msra.mxu0 %v477
        %533 = vmatpush.bf16.msra.mxu0 %v475
        %534 = vmatpush.bf16.msra.mxu0 %v473
        %535 = vmatpush.bf16.msra.mxu0 %v471
        %536 = vmatpush.bf16.msra.mxu0 %v469
        %537 = vmatmul.bf16.gmra.mxu0 %v382
        %v538 = vpop.f32.mrf.mxu0
        %v539 = vadd.f32 %v377, %v538
        %v540 = vpop.f32.mrf.mxu0
        %541 = vdwg.mxu0
        %542 = vmatpush.bf16.msra.mxu0 0
        %543 = vmatpush.bf16.msra.mxu0 0
        %544 = vmatpush.bf16.msra.mxu0 %v495
        %545 = vmatpush.bf16.msra.mxu0 %v493
        %546 = vmatpush.bf16.msra.mxu0 %v491
        %547 = vmatpush.bf16.msra.mxu0 %v489
        %548 = vmatpush.bf16.msra.mxu0 %v487
        %549 = vmatpush.bf16.msra.mxu0 %v485
        %550 = vmatmul.bf16.gmra.mxu0 %v527
        %v551 = vpop.f32.mrf.mxu0
        %v552 = vadd.f32 %v539, %v551
        %v553 = vpop.f32.mrf.mxu0
        %554 = vdwg.mxu0
        %555 = vmatpush.bf16.msra.mxu0 %v484
        %556 = vmatpush.bf16.msra.mxu0 %v482
        %557 = vmatpush.bf16.msra.mxu0 %v480
        %558 = vmatpush.bf16.msra.mxu0 %v478
        %559 = vmatpush.bf16.msra.mxu0 %v476
        %560 = vmatpush.bf16.msra.mxu0 %v474
        %561 = vmatpush.bf16.msra.mxu0 %v472
        %562 = vmatpush.bf16.msra.mxu0 %v470
        %563 = vmatmul.bf16.gmra.mxu0 %v382
        %v564 = vpop.f32.mrf.mxu0
        %v565 = vadd.f32 %v377, %v564
        %v566 = vpop.f32.mrf.mxu0
        %567 = vdwg.mxu0
        %568 = vmatpush.bf16.msra.mxu0 0
        %569 = vmatpush.bf16.msra.mxu0 0
        %570 = vmatpush.bf16.msra.mxu0 %v496
        %571 = vmatpush.bf16.msra.mxu0 %v494
        %572 = vmatpush.bf16.msra.mxu0 %v492
        %573 = vmatpush.bf16.msra.mxu0 %v490
        %574 = vmatpush.bf16.msra.mxu0 %v488
        %575 = vmatpush.bf16.msra.mxu0 %v486
        %576 = vmatmul.bf16.gmra.mxu0 %v527
        %v577 = vpop.f32.mrf.mxu0
        %v578 = vadd.f32 %v565, %v577
        %v579 = vpop.f32.mrf.mxu0
        %580 = vdwg.mxu0
        %vm581 = vcmp.ge.f32.partialorder %v552, 0.0
        %vm582 = vcmp.ge.f32.partialorder %v578, 0.0
        %v583 = vmul.f32 %v552, 0.1
        %v584 = vmul.f32 %v578, 0.1
        %v585 = vsel %vm581, %v552, %v583
        %v586 = vsel %vm582, %v578, %v584
        %587 = vst [vmem:[%s341] sm:$0xff] %v585
        %588 = vst [vmem:[%s341 + $0x8] sm:$0xff] %v586
        %s589 = smul.u32 2, %s19
        %p590 = scmp.lt.s32.totalorder %s18, 1
        %s591 = scalar_select %p590, %s18, 1
        %p592 = scmp.lt.s32.totalorder %s589, 3
        %s593 = scalar_select %p592, %s589, 3
        %s594 = smul.addr %s591, 4
        %s595 = sadd.s32 %s593, %s594
        %s596 = smul.addr %s595, 8
        %s597 = scalar_lea.vmem %s3, %s596
        // Predicated region
        $region71: #{a_call__.3} parent=65 // pred_check
          %p598 = pneg %p116
        $region72: #{a_call__.3} parent=65 // pred_check_branch
          %600 = sbr.rel (%p598) target = $region74
        $region73: #{a_call__.3} parent=65 // pred_region
          %s601 = smul.u32 2, %s19
        $region74: #{a_call__.3} parent=65 // pred_fallthru
          _
      $region66: #{a_call__.3} parent=5 // pred_fallthru
        _
      %p602 = scmp.le.s32.totalorder 2, %s9
      // Predicated region
      $region75: #{a_call__.3} parent=5 // pred_check
        %p603 = pneg %p602
      $region76: #{a_call__.3} parent=5 // pred_check_branch
        %605 = sbr.rel (%p603) target = $region78
      $region77: #{a_call__.3} parent=5 // pred_region
        %s606 = ssub.s32 %s9, 2
        // Predicated region
        $region79: #{a_call__.3} parent=77 // pred_check
          %p607 = pneg %p122
        $region80: #{a_call__.3} parent=77 // pred_check_branch
          %609 = sbr.rel (%p607) target = $region82
        $region81: #{a_call__.3} parent=77 // pred_region
          %s610 = smul.u32 2, %s21
          %p611 = scmp.lt.s32.totalorder %s20, 1
          %s612 = scalar_select %p611, %s20, 1
          %p613 = scmp.lt.s32.totalorder %s610, 3
          %s614 = scalar_select %p613, %s610, 3
          %s615 = smul.addr %s612, 4
          %s616 = sadd.s32 %s614, %s615
          %s617 = smul.addr %s616, 8
          %s618 = scalar_lea.vmem %s3, %s617
        $region82: #{a_call__.3} parent=77 // pred_fallthru
          _
      $region78: #{a_call__.3} parent=5 // pred_fallthru
        _
    $region6: #{a_call__.3} parent=1 // loop_footer
      %s13 = sadd.s32 1, %s9
    $region7: #{a_call__.3} parent=1 // loop_footer_branch
      %8 = sbr.rel target = $region3
    $region8: #{a_call__.3} parent=1 // loop_exit
      _

</llo_original>
